<compile_context>
chip_gen: v6e
topology: v6e:2x2x1
jax: 0.10.0
libtpu: 0.0.40
codegen_flags: <defaults>
</compile_context>

<pallas_src>
import jax
import jax.numpy as jnp
from jax.experimental import pallas as pl
from jax.experimental.pallas import tpu as pltpu


def _round_up(x, m):
    return ((x + m - 1) // m) * m


def value_net_kernel(x_ref, w1_ref, b1_ref, w2_ref, b2_ref, o_ref):
    # x_ref : (TB, S)   w1_ref: (S, H)   b1_ref: (1, H)
    # w2_ref: (1, H)    b2_ref: (1, 1) in SMEM      o_ref: (1, 1, TB)
    x = x_ref[...]
    # fc1 on the MXU: (TB, S) @ (S, H) -> (TB, H), f32 accumulation.
    h = jnp.dot(x, w1_ref[...], preferred_element_type=jnp.float32)
    # Bias + ReLU on the VPU, in f32 (safe on v5e which has no bf16 VPU path).
    h = jnp.maximum(h + b1_ref[...].astype(jnp.float32), 0.0)
    # fc2: output width is 1 -> VPU multiply + lane reduction (skip the MXU).
    vals = jnp.sum(h * w2_ref[...].astype(jnp.float32), axis=-1) + b2_ref[0, 0]
    # Lane-dense store: batch index lives on the lane axis of the output row.
    o_ref[...] = vals.reshape(1, 1, -1).astype(o_ref.dtype)


def value_net_forward(x, w1, b1, w2, b2, *, block_b=1024, cast_inputs_to_bf16=False):
    """Computes relu(x @ w1.T + b1) @ w2.T + b2 -> (B, 1).

    x: (B, S); w1: (H, S); b1: (H,); w2: (1, H); b2: (1,)  (PyTorch layouts).
    """
    B, S = x.shape
    H = w1.shape[0]

    # ---- host/XLA-side layout plumbing (free, once per call) ---------------
    w1_t = jnp.transpose(w1)                    # (S, H): MXU-friendly layout
    b1_row = b1.reshape(1, H)
    w2_row = w2.reshape(1, H)
    b2_s = b2.reshape(1, 1).astype(jnp.float32)  # SMEM scalar

    if cast_inputs_to_bf16:
        # Optional (v6e/v7x): halve HBM traffic of the B-scaling operand;
        # the MXU still accumulates in f32 and elementwise work stays f32.
        x = x.astype(jnp.bfloat16)
        w1_t = w1_t.astype(jnp.bfloat16)

    # ---- batch tiling -------------------------------------------------------
    block_b = max(8, _round_up(block_b, 8))      # f32 sublane multiple
    tb = min(block_b, _round_up(B, 8))
    grid_b = pl.cdiv(B, tb)
    b_pad = grid_b * tb
    if b_pad != B:
        x = jnp.pad(x, ((0, b_pad - B), (0, 0)))

    flops = 2 * b_pad * S * H + 2 * b_pad * H
    bytes_accessed = (b_pad * S + S * H + 2 * H + 1 + b_pad) * 4

    out = pl.pallas_call(
        value_net_kernel,
        out_shape=jax.ShapeDtypeStruct((grid_b, 1, tb), jnp.float32),
        grid=(grid_b,),
        in_specs=[
            pl.BlockSpec((tb, S), lambda i: (i, 0)),   # x: streamed per batch tile
            pl.BlockSpec((S, H), lambda i: (0, 0)),    # w1^T: resident in VMEM
            pl.BlockSpec((1, H), lambda i: (0, 0)),    # b1 row: resident
            pl.BlockSpec((1, H), lambda i: (0, 0)),    # w2 row: resident
            pl.BlockSpec(memory_space=pltpu.SMEM),     # b2 scalar in SMEM
        ],
        out_specs=pl.BlockSpec((1, 1, tb), lambda i: (i, 0, 0)),  # lane-dense rows
        compiler_params=pltpu.CompilerParams(
            dimension_semantics=("parallel",),         # v7x: shard tiles over 2 TCs
            vmem_limit_bytes=32 * 1024 * 1024,
        ),
        cost_estimate=pl.CostEstimate(
            flops=flops, transcendentals=0, bytes_accessed=bytes_accessed),
    )(x, w1_t, b1_row, w2_row, b2_s)

    # (grid_b, 1, tb) -> (b_pad, 1), drop padded rows.
    return out.reshape(b_pad, 1)[:B].astype(jnp.float32)


def init_params(key, state_dim, hidden_dim, dtype=jnp.float32):
    """Deterministic PyTorch-style (Kaiming-uniform-ish) init."""
    k1, k2, k3, k4 = jax.random.split(key, 4)
    bound1 = 1.0 / (state_dim ** 0.5)
    bound2 = 1.0 / (hidden_dim ** 0.5)
    w1 = jax.random.uniform(k1, (hidden_dim, state_dim), dtype, -bound1, bound1)
    b1 = jax.random.uniform(k2, (hidden_dim,), dtype, -bound1, bound1)
    w2 = jax.random.uniform(k3, (1, hidden_dim), dtype, -bound2, bound2)
    b2 = jax.random.uniform(k4, (1,), dtype, -bound2, bound2)
    return w1, b1, w2, b2


if __name__ == "__main__":
    key = jax.random.PRNGKey(0)
    kx, kp = jax.random.split(key)

    batch = 20          # deliberately NOT a multiple of the batch tile
    state_dim = 4       # e.g. CartPole observation size
    hidden_dim = 32

    x = jax.random.normal(kx, (batch, state_dim), dtype=jnp.float32)
    w1, b1, w2, b2 = init_params(kp, state_dim, hidden_dim)

    # Small block_b to exercise the batch grid (3 tiles of 8) + padding path.
    out = value_net_forward(x, w1, b1, w2, b2, block_b=8)
    jax.block_until_ready(out)

    # Pure-JAX reference: Linear -> ReLU -> Linear (fc2 expressed elementwise,
    # which is mathematically identical to h @ w2.T + b2).
    h_ref = jnp.maximum(x @ w1.T + b1, 0.0)
    ref = jnp.sum(h_ref * w2, axis=-1, keepdims=True) + b2

    assert out.shape == (batch, 1), out.shape
    assert jnp.allclose(out, ref, atol=1e-4, rtol=1e-4), float(
        jnp.max(jnp.abs(out - ref)))

    print("KERNEL_OK")
</pallas_src>

<mosaic_0001>
module attributes {stable_mosaic.version = 11 : i64} {
  func.func @value_net_kernel(%arg0: i32, %arg1: memref<8x4xf32, #tpu.memory_space<vmem>>, %arg2: memref<4x32xf32, #tpu.memory_space<vmem>>, %arg3: memref<1x32xf32, #tpu.memory_space<vmem>>, %arg4: memref<1x32xf32, #tpu.memory_space<vmem>>, %arg5: memref<1x1xf32, #tpu.memory_space<smem>>, %arg6: memref<1x1x8xf32, #tpu.memory_space<vmem>>) attributes {dimension_semantics = [#tpu.dimension_semantics<parallel>], iteration_bounds = array<i64: 3>, scalar_prefetch = 0 : i64, scratch_operands = 0 : i64, tpu.core_type = #tpu.core_type<tc>, window_params = [{transform_indices = @transform_0, window_bounds = array<i64: 8, 4>}, {pipeline_mode = #tpu.pipeline_mode<synchronous>, transform_indices = @transform_1, window_bounds = array<i64: 4, 32>}, {pipeline_mode = #tpu.pipeline_mode<synchronous>, transform_indices = @transform_2, window_bounds = array<i64: 1, 32>}, {pipeline_mode = #tpu.pipeline_mode<synchronous>, transform_indices = @transform_3, window_bounds = array<i64: 1, 32>}, {transform_indices = @transform_4, window_bounds = array<i64: 1, 1>}, {transform_indices = @transform_5, window_bounds = array<i64: 1, 1, 8>}]} {
    %c0 = arith.constant 0 : index
    %c0_0 = arith.constant 0 : index
    %0 = vector.load %arg1[%c0, %c0_0] : memref<8x4xf32, #tpu.memory_space<vmem>>, vector<8x4xf32>
    %c0_1 = arith.constant 0 : index
    %c0_2 = arith.constant 0 : index
    %1 = vector.load %arg2[%c0_1, %c0_2] : memref<4x32xf32, #tpu.memory_space<vmem>>, vector<4x32xf32>
    %cst = arith.constant dense<0.000000e+00> : vector<8x32xf32>
    %2 = tpu.matmul %0, %1, %cst {dimension_numbers = #tpu.dot_dimension_numbers<[1], [0], [0], [1], [0, 0, 1, 1], [], []>} : vector<8x4xf32>, vector<4x32xf32>, vector<8x32xf32> -> vector<8x32xf32>
    %c0_3 = arith.constant 0 : index
    %c0_4 = arith.constant 0 : index
    %3 = vector.load %arg3[%c0_3, %c0_4] : memref<1x32xf32, #tpu.memory_space<vmem>>, vector<1x32xf32>
    %4 = vector.broadcast %3 : vector<1x32xf32> to vector<8x32xf32>
    %5 = arith.addf %2, %4 : vector<8x32xf32>
    %cst_5 = arith.constant 0.000000e+00 : f32
    %6 = vector.broadcast %cst_5 : f32 to vector<8x32xf32>
    %7 = arith.maximumf %5, %6 : vector<8x32xf32>
    %c0_6 = arith.constant 0 : index
    %c0_7 = arith.constant 0 : index
    %8 = vector.load %arg4[%c0_6, %c0_7] : memref<1x32xf32, #tpu.memory_space<vmem>>, vector<1x32xf32>
    %9 = vector.broadcast %8 : vector<1x32xf32> to vector<8x32xf32>
    %10 = arith.mulf %7, %9 : vector<8x32xf32>
    %cst_8 = arith.constant dense<0.000000e+00> : vector<8xf32>
    %11 = vector.multi_reduction <add>, %10, %cst_8 [1] : vector<8x32xf32> to vector<8xf32>
    %c0_9 = arith.constant 0 : index
    %c0_10 = arith.constant 0 : index
    %12 = memref.load %arg5[%c0_9, %c0_10] : memref<1x1xf32, #tpu.memory_space<smem>>
    %13 = vector.broadcast %12 : f32 to vector<8xf32>
    %14 = arith.addf %11, %13 : vector<8xf32>
    %15 = vector.shape_cast %14 : vector<8xf32> to vector<1x1x8xf32>
    %c0_11 = arith.constant 0 : index
    %c0_12 = arith.constant 0 : index
    %c0_13 = arith.constant 0 : index
    %16 = vector.load %arg6[%c0_11, %c0_12, %c0_13] : memref<1x1x8xf32, #tpu.memory_space<vmem>>, vector<1x1x8xf32>
    tpu.vector_store %arg6[%c0_11, %c0_12, %c0_13], %15 {strides = array<i32>} : memref<1x1x8xf32, #tpu.memory_space<vmem>>, vector<1x1x8xf32>,
    return
  }
  func.func @transform_0(%arg0: i32) -> (i32, i32) {
    %c0_i32 = arith.constant 0 : i32
    %c0_i32_0 = arith.constant 0 : i32
    return %arg0, %c0_i32 : i32, i32
  }
  func.func @transform_1(%arg0: i32) -> (i32, i32) {
    %c0_i32 = arith.constant 0 : i32
    %c0_i32_0 = arith.constant 0 : i32
    %c0_i32_1 = arith.constant 0 : i32
    return %c0_i32, %c0_i32_0 : i32, i32
  }
  func.func @transform_2(%arg0: i32) -> (i32, i32) {
    %c0_i32 = arith.constant 0 : i32
    %c0_i32_0 = arith.constant 0 : i32
    %c0_i32_1 = arith.constant 0 : i32
    return %c0_i32, %c0_i32_0 : i32, i32
  }
  func.func @transform_3(%arg0: i32) -> (i32, i32) {
    %c0_i32 = arith.constant 0 : i32
    %c0_i32_0 = arith.constant 0 : i32
    %c0_i32_1 = arith.constant 0 : i32
    return %c0_i32, %c0_i32_0 : i32, i32
  }
  func.func @transform_4(%arg0: i32) -> (i32, i32) {
    %c0_i32 = arith.constant 0 : i32
    %c0_i32_0 = arith.constant 0 : i32
    %c0_i32_1 = arith.constant 0 : i32
    return %c0_i32, %c0_i32_0 : i32, i32
  }
  func.func @transform_5(%arg0: i32) -> (i32, i32, i32) {
    %c0_i32 = arith.constant 0 : i32
    %c0_i32_0 = arith.constant 0 : i32
    %c0_i32_1 = arith.constant 0 : i32
    return %arg0, %c0_i32, %c0_i32_0 : i32, i32, i32
  }
}

</mosaic_0001>

<llo_original>
// kernel: tpu_custom_call.1
$region0: #{tpu_custom_call.1}
  #allocation0 [shape = 'u32[]', space=smem, size = 0x4, offset = 0x4, fixed_abs, tag = 'smem constant byte address 0x4 - core index']
  #allocation1 [shape = 'u32[144,128]{1,0:T(1,128)}', space=vmem, size = 0x12000, scoped, tag = 'internal scratch']
  #allocation2 [shape = 'f32[1,1]{1,0:T(1,128)S(6)}', space=smem, size = 0x200, scoped, tag = 'scoped memory for tpu_custom_call.1']
  %s0 = inlined_call_operand.vmem [shape: f32[24,4], index: 0, kind: input, shape index: {}]
  %s1 = inlined_call_operand.vmem [shape: f32[4,32], index: 1, kind: input, shape index: {}]
  %s2 = inlined_call_operand.vmem [shape: f32[1,32], index: 2, kind: input, shape index: {}]
  %s3 = inlined_call_operand.vmem [shape: f32[1,32], index: 3, kind: input, shape index: {}]
  %s4 = inlined_call_operand.<no memory space> [shape: f32[1,1], index: 4, kind: input, shape index: {}]
  %s5 = inlined_call_operand.hbm [shape: f32[3,1,8], index: 5, kind: output, shape index: {}]
  %s6 = sld [smem:[#allocation0]]
  $region53: #{tpu_custom_call.1} parent=0
    _
  %s8 = ssub.s32 1, %s6
  %s9 = scalar_select 0, %s8, %s6
  %10 = sst [smem:[#allocation2]] %s4
  $region1: #{tpu_custom_call.1} parent=0
    #allocation3 [shape = 'u8[1024]{0}', space=vmem, size = 0x400, scoped, tag = 'output window, operand 0']
    #allocation4 [shape = 's32[2]{0}', space=sflag, size = 0x8, scoped, tag = 'scoped memory for tpu_custom_call.1']
    %11 = vsyncpa [#allocation4], 0
    %s12 = scalar_lea.sflag [#allocation4], 1
    %13 = vsyncpa %s12, 0
    loop: start=0, step=1, limit=5
    $region2: #{tpu_custom_call.1} parent=1 // loop_pre_header
      _
    $region3: #{tpu_custom_call.1} parent=1 // loop_header
      %s15 = sphi 0, %s19
      %p16 = scmp.ge.s32.totalorder %s15, 5
      %s25 = sphi 0, %s27
      %s28 = sphi 0, %s25
      %s29 = sphi 0, %s28
      %s45 = sphi 0, %s29
      %s49 = sphi 0, %s49
      %s51 = sphi 0, %s49
      %s52 = sphi 0, %s51
      %s66 = sphi 0, %s52
      %s70 = sphi 0, %s70
      %s72 = sphi 0, %s70
      %s73 = sphi 0, %s72
      %s87 = sphi 0, %s73
      %s91 = sphi 0, %s91
      %s93 = sphi 0, %s91
      %s94 = sphi 0, %s93
      %s108 = sphi 0, %s94
      %s112 = sphi 0, %s112
      %s114 = sphi 0, %s112
      %s115 = sphi 0, %s114
      %s129 = sphi 0, %s115
      %s135 = sphi 0, %s137
      %s138 = sphi 0, %s135
      %s139 = sphi 0, %s138
      %s155 = sphi 0, %s139
    $region4: #{tpu_custom_call.1} parent=1 // loop_header_branch
      %18 = sbr.rel (%p16) target = $region8
    $region5: #{tpu_custom_call.1} parent=1 // loop_body
      %s20 = ssub.s32 %s15, 1
      %s21 = ssub.s32 %s15, 2
      %s22 = sadd.s32 %s15, 1
      %s23 = ssub.s32 %s15, %s22
      %p24 = scmp.eq.s32.totalorder %s23, 0
      %s26 = sadd.s32 %s25, 1
      %s27 = scalar_select %p24, %s25, %s26
      %p30 = pneg %p24
      %p31 = scmp.eq.s32.totalorder %s15, 2
      %p32 = por %p30, %p31
      %p33 = scmp.ne.s32.totalorder %s25, %s28
      %p34 = scmp.eq.s32.totalorder %s15, 0
      %p35 = por %p33, %p34
      %p36 = scmp.ne.s32.totalorder %s25, %s28
      %p37 = scmp.eq.s32.totalorder %s20, 2
      %p38 = por %p36, %p37
      %p39 = scmp.ne.s32.totalorder %s28, %s29
      %p40 = scmp.eq.s32.totalorder %s20, 0
      %p41 = por %p39, %p40
      %p42 = scmp.ne.s32.totalorder %s28, %s29
      %p43 = scmp.eq.s32.totalorder %s21, 2
      %p44 = por %p42, %p43
      %p46 = scmp.ne.s32.totalorder %s29, %s45
      %p47 = scmp.eq.s32.totalorder %s21, 0
      %p48 = por %p46, %p47
      %s50 = sadd.s32 %s49, 1
      %p53 = scmp.eq.s32.totalorder %s15, 2
      %p54 = scmp.ne.s32.totalorder %s49, %s51
      %p55 = scmp.eq.s32.totalorder %s15, 0
      %p56 = por %p54, %p55
      %p57 = scmp.ne.s32.totalorder %s49, %s51
      %p58 = scmp.eq.s32.totalorder %s20, 2
      %p59 = por %p57, %p58
      %p60 = scmp.ne.s32.totalorder %s51, %s52
      %p61 = scmp.eq.s32.totalorder %s20, 0
      %p62 = por %p60, %p61
      %p63 = scmp.ne.s32.totalorder %s51, %s52
      %p64 = scmp.eq.s32.totalorder %s21, 2
      %p65 = por %p63, %p64
      %p67 = scmp.ne.s32.totalorder %s52, %s66
      %p68 = scmp.eq.s32.totalorder %s21, 0
      %p69 = por %p67, %p68
      %s71 = sadd.s32 %s70, 1
      %p74 = scmp.eq.s32.totalorder %s15, 2
      %p75 = scmp.ne.s32.totalorder %s70, %s72
      %p76 = scmp.eq.s32.totalorder %s15, 0
      %p77 = por %p75, %p76
      %p78 = scmp.ne.s32.totalorder %s70, %s72
      %p79 = scmp.eq.s32.totalorder %s20, 2
      %p80 = por %p78, %p79
      %p81 = scmp.ne.s32.totalorder %s72, %s73
      %p82 = scmp.eq.s32.totalorder %s20, 0
      %p83 = por %p81, %p82
      %p84 = scmp.ne.s32.totalorder %s72, %s73
      %p85 = scmp.eq.s32.totalorder %s21, 2
      %p86 = por %p84, %p85
      %p88 = scmp.ne.s32.totalorder %s73, %s87
      %p89 = scmp.eq.s32.totalorder %s21, 0
      %p90 = por %p88, %p89
      %s92 = sadd.s32 %s91, 1
      %p95 = scmp.eq.s32.totalorder %s15, 2
      %p96 = scmp.ne.s32.totalorder %s91, %s93
      %p97 = scmp.eq.s32.totalorder %s15, 0
      %p98 = por %p96, %p97
      %p99 = scmp.ne.s32.totalorder %s91, %s93
      %p100 = scmp.eq.s32.totalorder %s20, 2
      %p101 = por %p99, %p100
      %p102 = scmp.ne.s32.totalorder %s93, %s94
      %p103 = scmp.eq.s32.totalorder %s20, 0
      %p104 = por %p102, %p103
      %p105 = scmp.ne.s32.totalorder %s93, %s94
      %p106 = scmp.eq.s32.totalorder %s21, 2
      %p107 = por %p105, %p106
      %p109 = scmp.ne.s32.totalorder %s94, %s108
      %p110 = scmp.eq.s32.totalorder %s21, 0
      %p111 = por %p109, %p110
      %s113 = sadd.s32 %s112, 1
      %p116 = scmp.eq.s32.totalorder %s15, 2
      %p117 = scmp.ne.s32.totalorder %s112, %s114
      %p118 = scmp.eq.s32.totalorder %s15, 0
      %p119 = por %p117, %p118
      %p120 = scmp.ne.s32.totalorder %s112, %s114
      %p121 = scmp.eq.s32.totalorder %s20, 2
      %p122 = por %p120, %p121
      %p123 = scmp.ne.s32.totalorder %s114, %s115
      %p124 = scmp.eq.s32.totalorder %s20, 0
      %p125 = por %p123, %p124
      %p126 = scmp.ne.s32.totalorder %s114, %s115
      %p127 = scmp.eq.s32.totalorder %s21, 2
      %p128 = por %p126, %p127
      %p130 = scmp.ne.s32.totalorder %s115, %s129
      %p131 = scmp.eq.s32.totalorder %s21, 0
      %p132 = por %p130, %p131
      %s133 = ssub.s32 %s15, %s22
      %p134 = scmp.eq.s32.totalorder %s133, 0
      %s136 = sadd.s32 %s135, 1
      %s137 = scalar_select %p134, %s135, %s136
      %p140 = pneg %p134
      %p141 = scmp.eq.s32.totalorder %s15, 2
      %p142 = por %p140, %p141
      %p143 = scmp.ne.s32.totalorder %s135, %s138
      %p144 = scmp.eq.s32.totalorder %s15, 0
      %p145 = por %p143, %p144
      %p146 = scmp.ne.s32.totalorder %s135, %s138
      %p147 = scmp.eq.s32.totalorder %s20, 2
      %p148 = por %p146, %p147
      %p149 = scmp.ne.s32.totalorder %s138, %s139
      %p150 = scmp.eq.s32.totalorder %s20, 0
      %p151 = por %p149, %p150
      %p152 = scmp.ne.s32.totalorder %s138, %s139
      %p153 = scmp.eq.s32.totalorder %s21, 2
      %p154 = por %p152, %p153
      %p156 = scmp.ne.s32.totalorder %s139, %s155
      %p157 = scmp.eq.s32.totalorder %s21, 0
      %p158 = por %p156, %p157
      %p159 = scmp.le.s32.totalorder 1, %s15
      %p160 = scmp.lt.s32.totalorder %s15, 4
      %p161 = pnand %p159, %p160
      %p162 = pneg %p161
      // Predicated region
      $region9: #{tpu_custom_call.1} parent=5 // pred_check
        _
      $region10: #{tpu_custom_call.1} parent=5 // pred_check_branch
        %164 = sbr.rel (%p161) target = $region12
      $region11: #{tpu_custom_call.1} parent=5 // pred_region
        %s165 = ssub.s32 %s15, 1
        // Predicated region
        $region13: #{tpu_custom_call.1} parent=11 // pred_check
          %p166 = pneg %p62
        $region14: #{tpu_custom_call.1} parent=11 // pred_check_branch
          %168 = sbr.rel (%p166) target = $region16
        $region15: #{tpu_custom_call.1} parent=11 // pred_region
          _
        $region16: #{tpu_custom_call.1} parent=11 // pred_fallthru
          _
        // Predicated region
        $region17: #{tpu_custom_call.1} parent=11 // pred_check
          %p169 = pneg %p83
        $region18: #{tpu_custom_call.1} parent=11 // pred_check_branch
          %171 = sbr.rel (%p169) target = $region20
        $region19: #{tpu_custom_call.1} parent=11 // pred_region
          _
        $region20: #{tpu_custom_call.1} parent=11 // pred_fallthru
          _
        // Predicated region
        $region21: #{tpu_custom_call.1} parent=11 // pred_check
          %p172 = pneg %p104
        $region22: #{tpu_custom_call.1} parent=11 // pred_check_branch
          %174 = sbr.rel (%p172) target = $region24
        $region23: #{tpu_custom_call.1} parent=11 // pred_region
          _
        $region24: #{tpu_custom_call.1} parent=11 // pred_fallthru
          _
        // Predicated region
        $region25: #{tpu_custom_call.1} parent=11 // pred_check
          %p175 = pneg %p125
        $region26: #{tpu_custom_call.1} parent=11 // pred_check_branch
          %177 = sbr.rel (%p175) target = $region28
        $region27: #{tpu_custom_call.1} parent=11 // pred_region
          _
        $region28: #{tpu_custom_call.1} parent=11 // pred_fallthru
          _
      $region12: #{tpu_custom_call.1} parent=5 // pred_fallthru
        _
      %p178 = scmp.lt.s32.totalorder %s15, 3
      // Predicated region
      $region29: #{tpu_custom_call.1} parent=5 // pred_check
        %p179 = pneg %p178
      $region30: #{tpu_custom_call.1} parent=5 // pred_check_branch
        %181 = sbr.rel (%p179) target = $region32
      $region31: #{tpu_custom_call.1} parent=5 // pred_region
        // Predicated region
        $region33: #{tpu_custom_call.1} parent=31 // pred_check
          %p182 = pneg %p35
        $region34: #{tpu_custom_call.1} parent=31 // pred_check_branch
          %184 = sbr.rel (%p182) target = $region36
        $region35: #{tpu_custom_call.1} parent=31 // pred_region
          %p185 = scmp.lt.s32.totalorder %s15, 2
          %s186 = scalar_select %p185, %s15, 2
          %s187 = smul.addr %s186, 8
          %s188 = scalar_lea.vmem %s0, %s187
        $region36: #{tpu_custom_call.1} parent=31 // pred_fallthru
          _
      $region32: #{tpu_custom_call.1} parent=5 // pred_fallthru
        _
      %p189 = scmp.le.s32.totalorder 1, %s15
      %p190 = scmp.lt.s32.totalorder %s15, 4
      %p191 = pnand %p189, %p190
      %p192 = pneg %p191
      // Predicated region
      $region37: #{tpu_custom_call.1} parent=5 // pred_check
        _
      $region38: #{tpu_custom_call.1} parent=5 // pred_check_branch
        %194 = sbr.rel (%p191) target = $region40
      $region39: #{tpu_custom_call.1} parent=5 // pred_region
        %s195 = ssub.s32 %s15, 1
        %p196 = scmp.lt.s32.totalorder %s20, 2
        %s197 = scalar_select %p196, %s20, 2
        %s198 = smul.addr %s197, 8
        %s199 = scalar_lea.vmem %s0, %s198
        %p200 = pneg %p41
        %p201 = pneg %p38
        %p202 = pneg %p62
        %p203 = pneg %p59
        %p204 = pneg %p83
        %p205 = pneg %p80
        %p206 = pneg %p104
        %p207 = pneg %p101
        %p208 = pneg %p125
        %p209 = pneg %p122
        %p210 = pneg %p151
        %p211 = pneg %p148
        %s212 = sand.u32 %s138, 1
        %s213 = scalar_lea.sflag [#allocation4], %s212
        %s214 = sand.u32 %s138, 1
        %s215 = scalar_lea.vmem [#allocation3], %s214
        %p216 = scmp.lt.s32.totalorder %s20, 2
        %s217 = scalar_select %p216, %s20, 2
        %s218 = smul.addr %s217, 8
        %s219 = scalar_lea.vmem %s0, %s218
        %v220 = vld [vmem:[%s219] sm:$0xff]
        %v221 = vld [vmem:[%s1] sm:$0xf]
        %v222 = vld [vmem:[%s2] sm:$0x1]
        %v224 = vlaneseq
        %v225 = vshrl.u32 %v224, 7
        %v226 = vsub.s32 0, %v225
        %v227 = vrot.slane %v222, %v226
        %vm229 = vcmask 31744
        %v231 = vsel %vm229, %v220, 0
        %vm233 = vcmask 1043456
        %v235 = vsel %vm233, %v221, 0
        %237 = vmatprep.subr.mxu0 0.0
        %238 = vmatpush1.msra.mxu0 0.0
        %239 = vmatprep.subr.mxu0 0.0
        %240 = vmatpush1.msra.mxu0 0.0
        %241 = vmatprep.subr.mxu0 0.0
        %242 = vmatpush1.msra.mxu0 0.0
        %243 = vmatprep.subr.mxu0 0.0
        %244 = vmatpush1.msra.mxu0 0.0
        %245 = vmatprep.subr.mxu0 0.0
        %246 = vmatpush1.msra.mxu0 0.0
        %247 = vmatprep.subr.mxu0 0.0
        %248 = vmatpush1.msra.mxu0 0.0
        %249 = vmatprep.subr.mxu0 0.0
        %250 = vmatpush1.msra.mxu0 0.0
        %251 = vmatprep.subr.mxu0 0.0
        %252 = vmatpush1.msra.mxu0 0.0
        %253 = vmatprep.subr.mxu0 0.0
        %254 = vmatpush1.msra.mxu0 0.0
        %255 = vmatprep.subr.mxu0 0.0
        %256 = vmatpush1.msra.mxu0 0.0
        %257 = vmatprep.subr.mxu0 0.0
        %258 = vmatpush1.msra.mxu0 0.0
        %259 = vmatprep.subr.mxu0 0.0
        %260 = vmatpush1.msra.mxu0 0.0
        %261 = vmatprep.subr.mxu0 0.0
        %262 = vmatpush1.msra.mxu0 0.0
        %263 = vmatprep.subr.mxu0 0.0
        %264 = vmatpush1.msra.mxu0 0.0
        %265 = vmatprep.subr.mxu0 0.0
        %266 = vmatpush1.msra.mxu0 0.0
        %267 = vmatprep.subr.mxu0 0.0
        %268 = vmatpush1.msra.mxu0 %v235
        %269 = vmatprep.subr.mxu0 0.0
        %270 = vmatpush2.msra.mxu0 0.0
        %271 = vmatprep.subr.mxu0 0.0
        %272 = vmatpush2.msra.mxu0 0.0
        %273 = vmatprep.subr.mxu0 0.0
        %274 = vmatpush2.msra.mxu0 0.0
        %275 = vmatprep.subr.mxu0 0.0
        %276 = vmatpush2.msra.mxu0 0.0
        %277 = vmatprep.subr.mxu0 0.0
        %278 = vmatpush2.msra.mxu0 0.0
        %279 = vmatprep.subr.mxu0 0.0
        %280 = vmatpush2.msra.mxu0 0.0
        %281 = vmatprep.subr.mxu0 0.0
        %282 = vmatpush2.msra.mxu0 0.0
        %283 = vmatprep.subr.mxu0 0.0
        %284 = vmatpush2.msra.mxu0 0.0
        %285 = vmatprep.subr.mxu0 0.0
        %286 = vmatpush2.msra.mxu0 0.0
        %287 = vmatprep.subr.mxu0 0.0
        %288 = vmatpush2.msra.mxu0 0.0
        %289 = vmatprep.subr.mxu0 0.0
        %290 = vmatpush2.msra.mxu0 0.0
        %291 = vmatprep.subr.mxu0 0.0
        %292 = vmatpush2.msra.mxu0 0.0
        %293 = vmatprep.subr.mxu0 0.0
        %294 = vmatpush2.msra.mxu0 0.0
        %295 = vmatprep.subr.mxu0 0.0
        %296 = vmatpush2.msra.mxu0 0.0
        %297 = vmatprep.subr.mxu0 0.0
        %298 = vmatpush2.msra.mxu0 0.0
        %299 = vmatprep.subr.mxu0 0.0
        %300 = vmatpush2.msra.mxu0 0.0
        %301 = vmatprep.mubr.f32.mxu0 0.0
        %302 = vmatmul.mubr.f32.gmra.mxu0 %v231
        %v303 = vpop.f32.mrf.mxu0
        %v304 = vadd.f32 %v227, %v303
        %v305 = vpop.f32.mrf.mxu0
        %306 = vdwg.mxu0
        %v307 = vmax.f32 %v304, 0.0
        %v308 = vld [vmem:[%s3] sm:$0x1]
        %v310 = vlaneseq
        %v311 = vshrl.u32 %v310, 7
        %v312 = vsub.s32 0, %v311
        %v313 = vrot.slane %v308, %v312
        %v315 = vmul.f32 %v307, %v313
        %vm316 = vcmask 261120
        %v317 = vsel %vm316, %v315, 0.0
        %318 = vadd.xlane.f32.xlu0 %v317
        %v319 = vpop.xlane.xlu0 %318
        %s320 = sld [smem:[#allocation2]]
        %v321 = vstv %s320
        %v322 = vadd.f32 %v319, %v321
        %v324 = vlaneseq
        %v325 = vand.u32 %v324, 127
        %v326 = vlaneseq
        %v327 = vshrl.u32 %v326, 7
        %v328 = vsub.s32 %v325, %v327
        %v329 = vrot.slane %v322, %v328
        %vm331 = vcmask 57344
        %332 = vst.msk [vmem:[%s215] sm:$0x1] %vm331, %v329
        %s333 = sand.u32 %s138, 1
        %s334 = scalar_lea.sflag [#allocation4], %s333
        %s335 = sand.u32 %s138, 1
        %s336 = scalar_lea.vmem [#allocation3], %s335
        // Predicated region
        $region41: #{tpu_custom_call.1} parent=39 // pred_check
          %p337 = pneg %p148
        $region42: #{tpu_custom_call.1} parent=39 // pred_check_branch
          %339 = sbr.rel (%p337) target = $region44
        $region43: #{tpu_custom_call.1} parent=39 // pred_region
          %s341 = ssub.s32 16, 16
          %342 = vsyncadd %s334, %s341
          %s343 = smul.addr %s20, 16
          %s344 = scalar_lea.hbm %s5, %s343
          %s346 = sshll.u32 %s336, 4
          %s347 = int_to_ptr.vmem [resolvable:$true] %s346
          %349 = dma.vmem_to_hbm [thread:$0]  %s347, 16, %s344, %s334
        $region44: #{tpu_custom_call.1} parent=39 // pred_fallthru
          _
      $region40: #{tpu_custom_call.1} parent=5 // pred_fallthru
        _
      %p350 = scmp.le.s32.totalorder 2, %s15
      // Predicated region
      $region45: #{tpu_custom_call.1} parent=5 // pred_check
        %p351 = pneg %p350
      $region46: #{tpu_custom_call.1} parent=5 // pred_check_branch
        %353 = sbr.rel (%p351) target = $region48
      $region47: #{tpu_custom_call.1} parent=5 // pred_region
        %s354 = ssub.s32 %s15, 2
        // Predicated region
        $region49: #{tpu_custom_call.1} parent=47 // pred_check
          %p355 = pneg %p154
        $region50: #{tpu_custom_call.1} parent=47 // pred_check_branch
          %357 = sbr.rel (%p355) target = $region52
        $region51: #{tpu_custom_call.1} parent=47 // pred_region
          %s358 = sand.u32 %s139, 1
          %s359 = scalar_lea.sflag [#allocation4], %s358
          %s360 = sand.u32 %s139, 1
          %s361 = scalar_lea.vmem [#allocation3], %s360
          %362 = dma.done %s359, 16
        $region52: #{tpu_custom_call.1} parent=47 // pred_fallthru
          _
      $region48: #{tpu_custom_call.1} parent=5 // pred_fallthru
        _
    $region6: #{tpu_custom_call.1} parent=1 // loop_footer
      %s19 = sadd.s32 1, %s15
    $region7: #{tpu_custom_call.1} parent=1 // loop_footer_branch
      %14 = sbr.rel target = $region3
    $region8: #{tpu_custom_call.1} parent=1 // loop_exit
      _
    %363 = vsyncpa [#allocation4], 1
    %s364 = scalar_lea.sflag [#allocation4], 1
    %365 = vsyncpa %s364, 1

</llo_original>
